<compile_context>
chip_gen: v5e
topology: v5e:2x2
jax: 0.10.0
libtpu: 0.0.40
codegen_flags: <defaults>
</compile_context>

<pallas_src>
import jax
import jax.numpy as jnp
from jax import lax
from jax.experimental import pallas as pl
from jax.experimental.pallas import tpu as pltpu

# ---- static config (small, consistent with the module) ----
B = 2
S = 8
D_MODEL = 32
N_HEADS = 4
D_KEY = 8
D_VALUE = 8
TEMPERATURE = float(D_KEY) ** 0.5
LN_EPS = 1e-5

BS = B * S                 # 16 rows (batch folded into sublanes)
HDK = N_HEADS * D_KEY      # 32
HDV = N_HEADS * D_VALUE    # 32
HBS = N_HEADS * BS         # 64 (all-heads key/score columns)
LANES = 128

# power-of-two shifts used to build the block-diagonal masks in-kernel
_DK_SHIFT = D_KEY.bit_length() - 1     # 3
_DV_SHIFT = D_VALUE.bit_length() - 1   # 3
_BS_SHIFT = BS.bit_length() - 1        # 4

# ---- data slab row layout (everything at lane offset 0, 8-aligned rows) ----
_XQ_R0, _XQ_R1 = 0, BS            # x_q / residual  [16, 32]
_XV_R0, _XV_R1 = 16, 32           # x_v             [16, 32]
_XKT_R0, _XKT_R1 = 32, 64         # x_k^T           [32, 16]
_BIAS_R0, _BIAS_R1 = 64, 80       # bias (tiled)    [16, 64]
DATA_ROWS = 80

# ---- parameter slab row layout (built once, outside the per-call path) ----
_WQ_R0, _WQ_R1 = 0, 32            # WQ / temperature  [32, 32]
_WKT_R0, _WKT_R1 = 32, 64         # WK^T              [32, 32]
_WV_R0, _WV_R1 = 64, 96           # WV                [32, 32]
_WFF_R0, _WFF_R1 = 96, 128        # WFF               [32, 32]
_GAMMA_R = 128                    # gamma             [1, 32]
_BETA_R = 129                     # beta              [1, 32]
PARAM_ROWS = 136                  # padded to a multiple of 8


def mha_kernel(data_ref, par_ref, out_ref):
    # ---- whole-vreg row slices of the packed slabs (lane offset 0 -> no relayout) ----
    x_q = data_ref[_XQ_R0:_XQ_R1, 0:D_MODEL]         # [16, 32] (also the residual)
    x_v = data_ref[_XV_R0:_XV_R1, 0:D_MODEL]         # [16, 32]
    x_kT = data_ref[_XKT_R0:_XKT_R1, 0:BS]           # [32, 16]
    bias = data_ref[_BIAS_R0:_BIAS_R1, 0:HBS]        # [16, 64] additive 0 / -inf

    wq = par_ref[_WQ_R0:_WQ_R1, 0:HDK]               # [32, 32]  WQ / temperature
    wkT = par_ref[_WKT_R0:_WKT_R1, 0:D_MODEL]        # [32, 32]  WK^T
    wv = par_ref[_WV_R0:_WV_R1, 0:HDV]               # [32, 32]
    wff = par_ref[_WFF_R0:_WFF_R1, 0:D_MODEL]        # [32, 32]
    gamma = par_ref[_GAMMA_R:_GAMMA_R + 1, 0:D_MODEL]  # [1, 32]
    beta = par_ref[_BETA_R:_BETA_R + 1, 0:D_MODEL]     # [1, 32]

    # ---- projections: three small MXU matmuls; no in-kernel transposes / lane slices ----
    q_all = jnp.dot(x_q, wq, preferred_element_type=jnp.float32)    # [16, 32] (pre-scaled)
    kT = jnp.dot(wkT, x_kT, preferred_element_type=jnp.float32)     # [32, 16] = K_all^T
    v_all = jnp.dot(x_v, wv, preferred_element_type=jnp.float32)    # [16, 32]

    # ---- block-diagonal K^T: KBD[h*dk:(h+1)*dk, h*BS:(h+1)*BS] = kT_h ----
    kbd = jnp.concatenate([kT] * N_HEADS, axis=1)                   # [32, 64]
    kr = lax.broadcasted_iota(jnp.int32, (HDK, HBS), 0) >> _DK_SHIFT
    kc = lax.broadcasted_iota(jnp.int32, (HDK, HBS), 1) >> _BS_SHIFT
    kbd = jnp.where(kr == kc, kbd, 0.0)

    # ---- all heads' scores in ONE matmul, ONE softmax over the query axis ----
    # nn.Softmax(dim=2) on [B, H, Sq, Sk] normalizes over Sq == the row axis here;
    # cross-batch rows carry -inf bias and contribute exactly 0.
    scores = jnp.dot(q_all, kbd, preferred_element_type=jnp.float32) + bias   # [16, 64]
    m = jnp.max(scores, axis=0, keepdims=True)
    e = jnp.exp(scores - m)
    s = jnp.sum(e, axis=0, keepdims=True)
    inv = pl.reciprocal(s, approx=True)              # EUP slot, no VALU divide
    inv = inv * (2.0 - s * inv)                      # one Newton step -> ~f32 accuracy
    attn = e * inv                                   # [16, 64] lane-dense attention slab

    # ---- block-diagonal V, head merge and output projection: two MXU matmuls ----
    vbd = jnp.concatenate([v_all] * N_HEADS, axis=0)                # [64, 32]
    vr = lax.broadcasted_iota(jnp.int32, (HBS, HDV), 0) >> _BS_SHIFT
    vc = lax.broadcasted_iota(jnp.int32, (HBS, HDV), 1) >> _DV_SHIFT
    vbd = jnp.where(vr == vc, vbd, 0.0)

    heads = jnp.dot(attn, vbd, preferred_element_type=jnp.float32)  # [16, 32] = concat_h(attn_h @ v_h)
    ff = jnp.dot(heads, wff, preferred_element_type=jnp.float32)    # [16, 32]

    # ---- residual + LayerNorm(d_model), eps = 1e-5 ----
    # TODO(synk): training-mode dropout (on attn and on ff output) not implemented;
    # eval-mode dropout is the identity.
    acc = ff + x_q
    mean = jnp.mean(acc, axis=-1, keepdims=True)
    var = jnp.mean((acc - mean) ** 2, axis=-1, keepdims=True)
    y = (acc - mean) * lax.rsqrt(var + LN_EPS)
    y = y * gamma + beta

    # ---- single 128-lane-dense store: [ y(32) | attn(64) | zero pad(32) ] ----
    pad = jnp.zeros((BS, LANES - D_MODEL - HBS), jnp.float32)
    out_ref[...] = jnp.concatenate([y, attn, pad], axis=1)


def _pad_lanes(x):
    return jnp.pad(x, ((0, 0), (0, LANES - x.shape[1])))


def build_param_slab(WQ, WK, WV, WFF, gamma, beta):
    """Weight/parameter slab — built ONCE (hoisted out of the per-call path)."""
    return jnp.concatenate([
        _pad_lanes(WQ / TEMPERATURE),           # 1/temperature folded into W_Q
        _pad_lanes(WK.T),                       # K projection pre-transposed
        _pad_lanes(WV),
        _pad_lanes(WFF),
        _pad_lanes(gamma.reshape(1, D_MODEL)),
        _pad_lanes(beta.reshape(1, D_MODEL)),
        jnp.zeros((PARAM_ROWS - _BETA_R - 1, LANES), jnp.float32),
    ], axis=0).astype(jnp.float32)


@jax.jit
def multi_head_attention(Q, K, V, mask_f32, param_slab):
    # ---- per-call data slab: batch folded into rows + additive -inf block-diag bias ----
    xq2 = Q.reshape(BS, D_MODEL)
    xv2 = V.reshape(BS, D_MODEL)
    xkT = K.reshape(BS, D_MODEL).T                                   # [32, 16]

    idx = jnp.arange(BS)
    b_id = idx // S
    same_batch = b_id[:, None] == b_id[None, :]
    user = mask_f32[b_id[:, None], (idx % S)[:, None], (idx % S)[None, :]]
    masked = jnp.logical_or(jnp.logical_not(same_batch), user > 0.5)
    bias = jnp.where(masked, -jnp.inf, 0.0).astype(jnp.float32)      # [16, 16]
    bias_tiled = jnp.tile(bias, (1, N_HEADS))                        # [16, 64], head-major

    data_slab = jnp.concatenate([
        _pad_lanes(xq2), _pad_lanes(xv2), _pad_lanes(xkT), _pad_lanes(bias_tiled),
    ], axis=0)                                                       # [80, 128]

    out_merged = pl.pallas_call(
        mha_kernel,
        out_shape=jax.ShapeDtypeStruct((BS, LANES), jnp.float32),
        in_specs=[
            pl.BlockSpec(memory_space=pltpu.MemorySpace.VMEM),
            pl.BlockSpec(memory_space=pltpu.MemorySpace.VMEM),
        ],
        out_specs=pl.BlockSpec(memory_space=pltpu.MemorySpace.VMEM),
        cost_estimate=pl.CostEstimate(
            flops=2 * (4 * 16 * 32 * 32 + 2 * 16 * 32 * 64) + 8 * BS * HBS,
            transcendentals=BS * HBS + HBS + BS,     # exp + reciprocal + rsqrt
            bytes_accessed=4 * (DATA_ROWS + PARAM_ROWS + BS) * LANES,
        ),
        # Tiny footprint (~150 KB); generous scoped-VMEM cap, no grid needed.
        # (On v7x, many independent instances would instead get a leading
        #  "parallel" grid axis to use both TensorCores.)
        compiler_params=pltpu.CompilerParams(vmem_limit_bytes=4 * 1024 * 1024),
    )(data_slab, param_slab)

    # ---- split the merged lane-dense output ----
    out = out_merged[:, 0:D_MODEL].reshape(B, S, D_MODEL)
    attn_slab = out_merged[:, D_MODEL:D_MODEL + HBS]                 # [16, 64]
    # Cross-batch attention entries are exactly 0 (exp(-inf)), so summing over
    # the padded batch axis recovers the per-batch blocks (no python-loop slicing).
    attn = attn_slab.reshape(BS, N_HEADS, B, S).sum(axis=2)          # [(b,i), h, j]
    attn = attn.reshape(B, S, N_HEADS, S).transpose(0, 2, 1, 3)      # [B, H, S, S]
    return out, attn


def reference_mha(Q, K, V, mask_f32, WQ, WK, WV, WFF, gamma, beta):
    """Pure-JAX reference mirroring the PyTorch forward exactly."""
    q0 = (Q @ WQ).reshape(B, S, N_HEADS, D_KEY).transpose(0, 2, 1, 3)
    k0 = (K @ WK).reshape(B, S, N_HEADS, D_KEY).transpose(0, 2, 1, 3)
    v0 = (V @ WV).reshape(B, S, N_HEADS, D_VALUE).transpose(0, 2, 1, 3)
    scores = jnp.einsum('bhqd,bhkd->bhqk', q0, k0) / TEMPERATURE
    scores = jnp.where(mask_f32[:, None, :, :] > 0.5, -jnp.inf, scores)
    attn = jax.nn.softmax(scores, axis=2)   # dim=2 (query axis), as in the module
    out = jnp.einsum('bhqk,bhkd->bhqd', attn, v0)
    out = out.transpose(0, 2, 1, 3).reshape(B, S, N_HEADS * D_VALUE)
    ff = out @ WFF
    x = ff + Q
    mean = x.mean(-1, keepdims=True)
    var = ((x - mean) ** 2).mean(-1, keepdims=True)
    y = (x - mean) / jnp.sqrt(var + LN_EPS) * gamma + beta
    return y, attn


if __name__ == "__main__":
    key = jax.random.PRNGKey(0)
    kq, kk, kv, kwq, kwk, kwv, kwf = jax.random.split(key, 7)

    Q = jax.random.normal(kq, (B, S, D_MODEL), dtype=jnp.float32)
    K = jax.random.normal(kk, (B, S, D_MODEL), dtype=jnp.float32)
    V = jax.random.normal(kv, (B, S, D_MODEL), dtype=jnp.float32)

    # Causal-style mask (1.0 == masked): never fully masks a softmax column,
    # matching the original module's (fragile) -inf/NaN behavior only in the
    # non-degenerate regime.
    ii = jnp.arange(S)[:, None]
    jj = jnp.arange(S)[None, :]
    mask_f32 = jnp.broadcast_to((jj > ii).astype(jnp.float32), (B, S, S))

    # Deterministic parameter init (weights stored transposed for x @ W).
    scale = 1.0 / (D_MODEL ** 0.5)
    WQ = jax.random.normal(kwq, (D_MODEL, N_HEADS * D_KEY), jnp.float32) * scale
    WK = jax.random.normal(kwk, (D_MODEL, N_HEADS * D_KEY), jnp.float32) * scale
    WV = jax.random.normal(kwv, (D_MODEL, N_HEADS * D_VALUE), jnp.float32) * scale
    WFF = jax.random.normal(kwf, (N_HEADS * D_VALUE, D_MODEL), jnp.float32) * scale
    gamma = jnp.ones((1, D_MODEL), jnp.float32)   # LayerNorm default init
    beta = jnp.zeros((1, D_MODEL), jnp.float32)

    # Hoisted: built once, reused across calls.
    param_slab = build_param_slab(WQ, WK, WV, WFF, gamma, beta)

    out, attn = multi_head_attention(Q, K, V, mask_f32, param_slab)
    jax.block_until_ready((out, attn))

    ref_out, ref_attn = reference_mha(Q, K, V, mask_f32, WQ, WK, WV, WFF, gamma, beta)
    assert out.shape == (B, S, D_MODEL) and attn.shape == (B, N_HEADS, S, S)
    assert jnp.allclose(out, ref_out, atol=1e-4, rtol=1e-4), \
        float(jnp.max(jnp.abs(out - ref_out)))
    assert jnp.allclose(attn, ref_attn, atol=1e-4, rtol=1e-4), \
        float(jnp.max(jnp.abs(attn - ref_attn)))

    print("KERNEL_OK")
</pallas_src>

<mosaic_0001>
module attributes {stable_mosaic.version = 11 : i64} {
  func.func @mha_kernel(%arg0: memref<80x128xf32, #tpu.memory_space<vmem>>, %arg1: memref<136x128xf32, #tpu.memory_space<vmem>>, %arg2: memref<16x128xf32, #tpu.memory_space<vmem>>) attributes {dimension_semantics = [], scalar_prefetch = 0 : i64, scratch_operands = 0 : i64, tpu.core_type = #tpu.core_type<tc>} {
    %c0 = arith.constant 0 : index
    %c0_0 = arith.constant 0 : index
    %0 = vector.load %arg0[%c0, %c0_0] : memref<80x128xf32, #tpu.memory_space<vmem>>, vector<16x32xf32>
    %c16 = arith.constant 16 : index
    %c0_1 = arith.constant 0 : index
    %1 = vector.load %arg0[%c16, %c0_1] : memref<80x128xf32, #tpu.memory_space<vmem>>, vector<16x32xf32>
    %c32 = arith.constant 32 : index
    %c0_2 = arith.constant 0 : index
    %2 = vector.load %arg0[%c32, %c0_2] : memref<80x128xf32, #tpu.memory_space<vmem>>, vector<32x16xf32>
    %c64 = arith.constant 64 : index
    %c0_3 = arith.constant 0 : index
    %3 = vector.load %arg0[%c64, %c0_3] : memref<80x128xf32, #tpu.memory_space<vmem>>, vector<16x64xf32>
    %c0_4 = arith.constant 0 : index
    %c0_5 = arith.constant 0 : index
    %4 = vector.load %arg1[%c0_4, %c0_5] : memref<136x128xf32, #tpu.memory_space<vmem>>, vector<32x32xf32>
    %c32_6 = arith.constant 32 : index
    %c0_7 = arith.constant 0 : index
    %5 = vector.load %arg1[%c32_6, %c0_7] : memref<136x128xf32, #tpu.memory_space<vmem>>, vector<32x32xf32>
    %c64_8 = arith.constant 64 : index
    %c0_9 = arith.constant 0 : index
    %6 = vector.load %arg1[%c64_8, %c0_9] : memref<136x128xf32, #tpu.memory_space<vmem>>, vector<32x32xf32>
    %c96 = arith.constant 96 : index
    %c0_10 = arith.constant 0 : index
    %7 = vector.load %arg1[%c96, %c0_10] : memref<136x128xf32, #tpu.memory_space<vmem>>, vector<32x32xf32>
    %c128 = arith.constant 128 : index
    %c0_11 = arith.constant 0 : index
    %8 = vector.load %arg1[%c128, %c0_11] : memref<136x128xf32, #tpu.memory_space<vmem>>, vector<1x32xf32>
    %c129 = arith.constant 129 : index
    %c0_12 = arith.constant 0 : index
    %9 = vector.load %arg1[%c129, %c0_12] : memref<136x128xf32, #tpu.memory_space<vmem>>, vector<1x32xf32>
    %cst = arith.constant dense<0.000000e+00> : vector<16x32xf32>
    %10 = tpu.matmul %0, %4, %cst {dimension_numbers = #tpu.dot_dimension_numbers<[1], [0], [0], [1], [0, 0, 1, 1], [], []>} : vector<16x32xf32>, vector<32x32xf32>, vector<16x32xf32> -> vector<16x32xf32>
    %cst_13 = arith.constant dense<0.000000e+00> : vector<32x16xf32>
    %11 = tpu.matmul %5, %2, %cst_13 {dimension_numbers = #tpu.dot_dimension_numbers<[1], [0], [0], [1], [0, 0, 1, 1], [], []>} : vector<32x32xf32>, vector<32x16xf32>, vector<32x16xf32> -> vector<32x16xf32>
    %cst_14 = arith.constant dense<0.000000e+00> : vector<16x32xf32>
    %12 = tpu.matmul %1, %6, %cst_14 {dimension_numbers = #tpu.dot_dimension_numbers<[1], [0], [0], [1], [0, 0, 1, 1], [], []>} : vector<16x32xf32>, vector<32x32xf32>, vector<16x32xf32> -> vector<16x32xf32>
    %13 = tpu.concatenate %11, %11, %11, %11 in 1 : vector<32x16xf32>, vector<32x16xf32>, vector<32x16xf32>, vector<32x16xf32> -> vector<32x64xf32>
    %14 = tpu.iota {dimensions = array<i32: 0>} : vector<32x64xi32>
    %c3_i32 = arith.constant 3 : i32
    %15 = vector.broadcast %c3_i32 : i32 to vector<32x64xi32>
    %16 = arith.shrsi %14, %15 : vector<32x64xi32>
    %17 = tpu.iota {dimensions = array<i32: 1>} : vector<32x64xi32>
    %c4_i32 = arith.constant 4 : i32
    %18 = vector.broadcast %c4_i32 : i32 to vector<32x64xi32>
    %19 = arith.shrsi %17, %18 : vector<32x64xi32>
    %20 = arith.cmpi eq, %16, %19 : vector<32x64xi32>
    %cst_15 = arith.constant 0.000000e+00 : f32
    %21 = vector.broadcast %cst_15 : f32 to vector<32x64xf32>
    %22 = arith.select %20, %13, %21 : vector<32x64xi1>, vector<32x64xf32>
    %cst_16 = arith.constant dense<0.000000e+00> : vector<16x64xf32>
    %23 = tpu.matmul %10, %22, %cst_16 {dimension_numbers = #tpu.dot_dimension_numbers<[1], [0], [0], [1], [0, 0, 1, 1], [], []>} : vector<16x32xf32>, vector<32x64xf32>, vector<16x64xf32> -> vector<16x64xf32>
    %24 = arith.addf %23, %3 : vector<16x64xf32>
    %cst_17 = arith.constant dense<0xFF800000> : vector<64xf32>
    %25 = vector.multi_reduction <maximumf>, %24, %cst_17 [0] : vector<16x64xf32> to vector<64xf32>
    %26 = vector.shape_cast %25 : vector<64xf32> to vector<1x64xf32>
    %27 = vector.broadcast %26 : vector<1x64xf32> to vector<16x64xf32>
    %28 = arith.subf %24, %27 : vector<16x64xf32>
    %29 = math.exp %28 : vector<16x64xf32>
    %cst_18 = arith.constant dense<0.000000e+00> : vector<64xf32>
    %30 = vector.multi_reduction <add>, %29, %cst_18 [0] : vector<16x64xf32> to vector<64xf32>
    %31 = vector.shape_cast %30 : vector<64xf32> to vector<1x64xf32>
    %32 = tpu.reciprocal %31 {approx = true} : vector<1x64xf32> -> vector<1x64xf32>
    %33 = arith.mulf %31, %32 : vector<1x64xf32>
    %cst_19 = arith.constant 2.000000e+00 : f32
    %34 = vector.broadcast %cst_19 : f32 to vector<1x64xf32>
    %35 = arith.subf %34, %33 : vector<1x64xf32>
    %36 = arith.mulf %32, %35 : vector<1x64xf32>
    %37 = vector.broadcast %36 : vector<1x64xf32> to vector<16x64xf32>
    %38 = arith.mulf %29, %37 : vector<16x64xf32>
    %39 = tpu.concatenate %12, %12, %12, %12 in 0 : vector<16x32xf32>, vector<16x32xf32>, vector<16x32xf32>, vector<16x32xf32> -> vector<64x32xf32>
    %40 = tpu.iota {dimensions = array<i32: 0>} : vector<64x32xi32>
    %c4_i32_20 = arith.constant 4 : i32
    %41 = vector.broadcast %c4_i32_20 : i32 to vector<64x32xi32>
    %42 = arith.shrsi %40, %41 : vector<64x32xi32>
    %43 = tpu.iota {dimensions = array<i32: 1>} : vector<64x32xi32>
    %c3_i32_21 = arith.constant 3 : i32
    %44 = vector.broadcast %c3_i32_21 : i32 to vector<64x32xi32>
    %45 = arith.shrsi %43, %44 : vector<64x32xi32>
    %46 = arith.cmpi eq, %42, %45 : vector<64x32xi32>
    %cst_22 = arith.constant 0.000000e+00 : f32
    %47 = vector.broadcast %cst_22 : f32 to vector<64x32xf32>
    %48 = arith.select %46, %39, %47 : vector<64x32xi1>, vector<64x32xf32>
    %cst_23 = arith.constant dense<0.000000e+00> : vector<16x32xf32>
    %49 = tpu.matmul %38, %48, %cst_23 {dimension_numbers = #tpu.dot_dimension_numbers<[1], [0], [0], [1], [0, 0, 1, 1], [], []>} : vector<16x64xf32>, vector<64x32xf32>, vector<16x32xf32> -> vector<16x32xf32>
    %cst_24 = arith.constant dense<0.000000e+00> : vector<16x32xf32>
    %50 = tpu.matmul %49, %7, %cst_24 {dimension_numbers = #tpu.dot_dimension_numbers<[1], [0], [0], [1], [0, 0, 1, 1], [], []>} : vector<16x32xf32>, vector<32x32xf32>, vector<16x32xf32> -> vector<16x32xf32>
    %51 = arith.addf %50, %0 : vector<16x32xf32>
    %cst_25 = arith.constant dense<0.000000e+00> : vector<16xf32>
    %52 = vector.multi_reduction <add>, %51, %cst_25 [1] : vector<16x32xf32> to vector<16xf32>
    %53 = vector.shape_cast %52 : vector<16xf32> to vector<16x1xf32>
    %cst_26 = arith.constant 3.200000e+01 : f32
    %54 = vector.broadcast %cst_26 : f32 to vector<16x1xf32>
    %55 = arith.divf %53, %54 : vector<16x1xf32>
    %56 = vector.broadcast %55 : vector<16x1xf32> to vector<16x32xf32>
    %57 = arith.subf %51, %56 : vector<16x32xf32>
    %58 = arith.mulf %57, %57 : vector<16x32xf32>
    %cst_27 = arith.constant dense<0.000000e+00> : vector<16xf32>
    %59 = vector.multi_reduction <add>, %58, %cst_27 [1] : vector<16x32xf32> to vector<16xf32>
    %60 = vector.shape_cast %59 : vector<16xf32> to vector<16x1xf32>
    %cst_28 = arith.constant 3.200000e+01 : f32
    %61 = vector.broadcast %cst_28 : f32 to vector<16x1xf32>
    %62 = arith.divf %60, %61 : vector<16x1xf32>
    %63 = vector.broadcast %55 : vector<16x1xf32> to vector<16x32xf32>
    %64 = arith.subf %51, %63 : vector<16x32xf32>
    %cst_29 = arith.constant 9.99999974E-6 : f32
    %65 = vector.broadcast %cst_29 : f32 to vector<16x1xf32>
    %66 = arith.addf %62, %65 : vector<16x1xf32>
    %67 = math.rsqrt %66 : vector<16x1xf32>
    %68 = vector.broadcast %67 : vector<16x1xf32> to vector<16x32xf32>
    %69 = arith.mulf %64, %68 : vector<16x32xf32>
    %70 = vector.broadcast %8 : vector<1x32xf32> to vector<16x32xf32>
    %71 = arith.mulf %69, %70 : vector<16x32xf32>
    %72 = vector.broadcast %9 : vector<1x32xf32> to vector<16x32xf32>
    %73 = arith.addf %71, %72 : vector<16x32xf32>
    %cst_30 = arith.constant 0.000000e+00 : f32
    %74 = vector.broadcast %cst_30 : f32 to vector<16x32xf32>
    %75 = tpu.concatenate %73, %38, %74 in 1 : vector<16x32xf32>, vector<16x64xf32>, vector<16x32xf32> -> vector<16x128xf32>
    %c0_31 = arith.constant 0 : index
    %c0_32 = arith.constant 0 : index
    %76 = vector.load %arg2[%c0_31, %c0_32] : memref<16x128xf32, #tpu.memory_space<vmem>>, vector<16x128xf32>
    tpu.vector_store %arg2[%c0_31, %c0_32], %75 {strides = array<i32>} : memref<16x128xf32, #tpu.memory_space<vmem>>, vector<16x128xf32>,
    return
  }
}

</mosaic_0001>

<llo_original>
// kernel: tile.9
$region0: #{tile.9}
  %s0 = inlined_call_operand.vmem [shape: f32[16,4,16], index: 0, kind: input, shape index: {}]
  %s1 = inlined_call_operand.vmem [shape: f32[16,64], index: 1, kind: output, shape index: {}]
  $region1: #{tile.9} parent=0
    #allocation0 [shape = 'u8[65536]{0}', space=vmem, size = 0x10000, scoped, tag = 'scoped mem for input reshape']
    %s3 = ssub.s32 16, 1
    %s4 = scalar_lea.vmem %s0, 60
    %v5 = vld [vmem:[%s4] sm:%s3]
    %s6 = scalar_lea.vmem [#allocation0], 120
    %7 = vst [vmem:[%s6] sm:%s3] %v5
    %s8 = scalar_lea.vmem %s0, 56
    %v9 = vld [vmem:[%s8] sm:%s3]
    %s10 = scalar_lea.vmem [#allocation0], 112
    %11 = vst [vmem:[%s10] sm:%s3] %v9
    %s12 = scalar_lea.vmem %s0, 52
    %v13 = vld [vmem:[%s12] sm:%s3]
    %s14 = scalar_lea.vmem [#allocation0], 104
    %15 = vst [vmem:[%s14] sm:%s3] %v13
    %s16 = scalar_lea.vmem %s0, 48
    %v17 = vld [vmem:[%s16] sm:%s3]
    %s18 = scalar_lea.vmem [#allocation0], 96
    %19 = vst [vmem:[%s18] sm:%s3] %v17
    %s20 = scalar_lea.vmem %s0, 44
    %v21 = vld [vmem:[%s20] sm:%s3]
    %s22 = scalar_lea.vmem [#allocation0], 88
    %23 = vst [vmem:[%s22] sm:%s3] %v21
    %s24 = scalar_lea.vmem %s0, 40
    %v25 = vld [vmem:[%s24] sm:%s3]
    %s26 = scalar_lea.vmem [#allocation0], 80
    %27 = vst [vmem:[%s26] sm:%s3] %v25
    %s28 = scalar_lea.vmem %s0, 36
    %v29 = vld [vmem:[%s28] sm:%s3]
    %s30 = scalar_lea.vmem [#allocation0], 72
    %31 = vst [vmem:[%s30] sm:%s3] %v29
    %s32 = scalar_lea.vmem %s0, 32
    %v33 = vld [vmem:[%s32] sm:%s3]
    %s34 = scalar_lea.vmem [#allocation0], 64
    %35 = vst [vmem:[%s34] sm:%s3] %v33
    %s36 = scalar_lea.vmem %s0, 28
    %v37 = vld [vmem:[%s36] sm:%s3]
    %s38 = scalar_lea.vmem [#allocation0], 56
    %39 = vst [vmem:[%s38] sm:%s3] %v37
    %s40 = scalar_lea.vmem %s0, 24
    %v41 = vld [vmem:[%s40] sm:%s3]
    %s42 = scalar_lea.vmem [#allocation0], 48
    %43 = vst [vmem:[%s42] sm:%s3] %v41
    %s44 = scalar_lea.vmem %s0, 20
    %v45 = vld [vmem:[%s44] sm:%s3]
    %s46 = scalar_lea.vmem [#allocation0], 40
    %47 = vst [vmem:[%s46] sm:%s3] %v45
    %s48 = scalar_lea.vmem %s0, 16
    %v49 = vld [vmem:[%s48] sm:%s3]
    %s50 = scalar_lea.vmem [#allocation0], 32
    %51 = vst [vmem:[%s50] sm:%s3] %v49
    %s52 = scalar_lea.vmem %s0, 12
    %v53 = vld [vmem:[%s52] sm:%s3]
    %s54 = scalar_lea.vmem [#allocation0], 24
    %55 = vst [vmem:[%s54] sm:%s3] %v53
    %s56 = scalar_lea.vmem %s0, 8
    %v57 = vld [vmem:[%s56] sm:%s3]
    %s58 = scalar_lea.vmem [#allocation0], 16
    %59 = vst [vmem:[%s58] sm:%s3] %v57
    %s60 = scalar_lea.vmem %s0, 4
    %v61 = vld [vmem:[%s60] sm:%s3]
    %s62 = scalar_lea.vmem [#allocation0], 8
    %63 = vst [vmem:[%s62] sm:%s3] %v61
    %v64 = vld [vmem:[%s0] sm:%s3]
    %65 = vst [vmem:[#allocation0] sm:%s3] %v64
    %v66 = vld [vmem:[#allocation0] ss:$8 sm:$0xf]
    %v67 = vld [vmem:[#allocation0] ss:$8 sm:$0xf0]
    %vm68 = vcmask 1047556
    %v69 = vsel %vm68, %v67, %v66
    %vm70 = vcmask 130048
    %71 = vst.msk [vmem:[%s1] sm:$0xff] %vm70, %v69
    %s72 = scalar_lea.vmem [#allocation0], 64
    %v73 = vld [vmem:[%s72] ss:$8 sm:$0xf]
    %s74 = scalar_lea.vmem [#allocation0], 64
    %v75 = vld [vmem:[%s74] ss:$8 sm:$0xf0]
    %vm76 = vcmask 1047556
    %v77 = vsel %vm76, %v75, %v73
    %vm78 = vcmask 130048
    %s79 = scalar_lea.vmem %s1, 8
    %80 = vst.msk [vmem:[%s79] sm:$0xff] %vm78, %v77
    %s81 = scalar_lea.vmem [#allocation0], 3
    %v82 = vld [vmem:[%s81] ss:$8 sm:$0xf]
    %s83 = scalar_lea.vmem [#allocation0], 3
    %v84 = vld [vmem:[%s83] ss:$8 sm:$0xf0]
    %vm85 = vcmask 1047556
    %v86 = vsel %vm85, %v84, %v82
    %87 = vrot.lane.b32.xlu0 %v86, 48
    %v88 = vpop.permute.xlu0 %87
    %vm89 = vcmask 523648
    %90 = vst.msk [vmem:[%s1] sm:$0xff] %vm89, %v88
    %s91 = scalar_lea.vmem [#allocation0], 67
    %v92 = vld [vmem:[%s91] ss:$8 sm:$0xf]
    %s93 = scalar_lea.vmem [#allocation0], 67
    %v94 = vld [vmem:[%s93] ss:$8 sm:$0xf0]
    %vm95 = vcmask 1047556
    %v96 = vsel %vm95, %v94, %v92
    %97 = vrot.lane.b32.xlu0 %v96, 48
    %v98 = vpop.permute.xlu0 %97
    %vm99 = vcmask 523648
    %s100 = scalar_lea.vmem %s1, 8
    %101 = vst.msk [vmem:[%s100] sm:$0xff] %vm99, %v98
    %s102 = scalar_lea.vmem [#allocation0], 2
    %v103 = vld [vmem:[%s102] ss:$8 sm:$0xf]
    %s104 = scalar_lea.vmem [#allocation0], 2
    %v105 = vld [vmem:[%s104] ss:$8 sm:$0xf0]
    %vm106 = vcmask 1047556
    %v107 = vsel %vm106, %v105, %v103
    %108 = vrot.lane.b32.xlu0 %v107, 32
    %v109 = vpop.permute.xlu0 %108
    %vm110 = vcmask 392448
    %111 = vst.msk [vmem:[%s1] sm:$0xff] %vm110, %v109
    %s112 = scalar_lea.vmem [#allocation0], 66
    %v113 = vld [vmem:[%s112] ss:$8 sm:$0xf]
    %s114 = scalar_lea.vmem [#allocation0], 66
    %v115 = vld [vmem:[%s114] ss:$8 sm:$0xf0]
    %vm116 = vcmask 1047556
    %v117 = vsel %vm116, %v115, %v113
    %118 = vrot.lane.b32.xlu0 %v117, 32
    %v119 = vpop.permute.xlu0 %118
    %vm120 = vcmask 392448
    %s121 = scalar_lea.vmem %s1, 8
    %122 = vst.msk [vmem:[%s121] sm:$0xff] %vm120, %v119
    %s123 = scalar_lea.vmem [#allocation0], 1
    %v124 = vld [vmem:[%s123] ss:$8 sm:$0xf]
    %s125 = scalar_lea.vmem [#allocation0], 1
    %v126 = vld [vmem:[%s125] ss:$8 sm:$0xf0]
    %vm127 = vcmask 1047556
    %v128 = vsel %vm127, %v126, %v124
    %129 = vrot.lane.b32.xlu0 %v128, 16
    %v130 = vpop.permute.xlu0 %129
    %vm131 = vcmask 261248
    %132 = vst.msk [vmem:[%s1] sm:$0xff] %vm131, %v130
    %s133 = scalar_lea.vmem [#allocation0], 65
    %v134 = vld [vmem:[%s133] ss:$8 sm:$0xf]
    %s135 = scalar_lea.vmem [#allocation0], 65
    %v136 = vld [vmem:[%s135] ss:$8 sm:$0xf0]
    %vm137 = vcmask 1047556
    %v138 = vsel %vm137, %v136, %v134
    %139 = vrot.lane.b32.xlu0 %v138, 16
    %v140 = vpop.permute.xlu0 %139
    %vm141 = vcmask 261248
    %s142 = scalar_lea.vmem %s1, 8
    %143 = vst.msk [vmem:[%s142] sm:$0xff] %vm141, %v140

// kernel: multi_head_attention.1
$region0: #{multi_head_attention.1}
  #allocation0 [shape = 'u32[]', space=smem, size = 0x4, offset = 0x4, fixed_abs, tag = 'smem constant byte address 0x4 - core index']
  #allocation1 [shape = 'u32[72,128]{1,0:T(1,128)}', space=vmem, size = 0x9000, scoped, tag = 'internal scratch']
  %s0 = inlined_call_operand.vmem [shape: f32[80,128], index: 0, kind: input, shape index: {}]
  %s1 = inlined_call_operand.vmem [shape: f32[136,128], index: 1, kind: input, shape index: {}]
  %s2 = inlined_call_operand.vmem [shape: f32[16,128], index: 2, kind: output, shape index: {}]
  %s3 = sld [smem:[#allocation0]]
  $region18: #{multi_head_attention.1} parent=0
    _
  %s5 = ssub.s32 1, %s3
  %s6 = scalar_select 0, %s5, %s3
  // Predicated region
  $region2: #{multi_head_attention.1} parent=0 // pred_check
    _
  $region3: #{multi_head_attention.1} parent=0 // pred_check_branch
    %8 = sbr.rel (0) target = $region5
  $region4: #{multi_head_attention.1} parent=0 // pred_region
    _
  $region5: #{multi_head_attention.1} parent=0 // pred_fallthru
    _
  // Predicated region
  $region6: #{multi_head_attention.1} parent=0 // pred_check
    _
  $region7: #{multi_head_attention.1} parent=0 // pred_check_branch
    %10 = sbr.rel (0) target = $region9
  $region8: #{multi_head_attention.1} parent=0 // pred_region
    _
  $region9: #{multi_head_attention.1} parent=0 // pred_fallthru
    _
  %v11 = vld [vmem:[%s0] sm:$0xff]
  %v12 = vld [vmem:[%s0 + $0x8] sm:$0xff]
  %v13 = vld [vmem:[%s0 + $0x10] sm:$0xff]
  %v14 = vld [vmem:[%s0 + $0x18] sm:$0xff]
  %v15 = vld [vmem:[%s0 + $0x20] sm:$0xff]
  %v16 = vld [vmem:[%s0 + $0x28] sm:$0xff]
  %v17 = vld [vmem:[%s0 + $0x30] sm:$0xff]
  %v18 = vld [vmem:[%s0 + $0x38] sm:$0xff]
  %v19 = vld [vmem:[%s0 + $0x40] sm:$0xff]
  %v20 = vld [vmem:[%s0 + $0x48] sm:$0xff]
  %v21 = vld [vmem:[%s1] sm:$0xff]
  %v22 = vld [vmem:[%s1 + $0x8] sm:$0xff]
  %v23 = vld [vmem:[%s1 + $0x10] sm:$0xff]
  %v24 = vld [vmem:[%s1 + $0x18] sm:$0xff]
  %v25 = vld [vmem:[%s1 + $0x20] sm:$0xff]
  %v26 = vld [vmem:[%s1 + $0x28] sm:$0xff]
  %v27 = vld [vmem:[%s1 + $0x30] sm:$0xff]
  %v28 = vld [vmem:[%s1 + $0x38] sm:$0xff]
  %v29 = vld [vmem:[%s1 + $0x40] sm:$0xff]
  %v30 = vld [vmem:[%s1 + $0x48] sm:$0xff]
  %v31 = vld [vmem:[%s1 + $0x50] sm:$0xff]
  %v32 = vld [vmem:[%s1 + $0x58] sm:$0xff]
  %v33 = vld [vmem:[%s1 + $0x60] sm:$0xff]
  %v34 = vld [vmem:[%s1 + $0x68] sm:$0xff]
  %v35 = vld [vmem:[%s1 + $0x70] sm:$0xff]
  %v36 = vld [vmem:[%s1 + $0x78] sm:$0xff]
  %v37 = vld [vmem:[%s1 + $0x80] sm:$0x1]
  %v38 = vld [vmem:[%s1 + $0x81] sm:$0x1]
  %vm39 = vcmask 261120
  %v41 = vsel %vm39, %v11, 0
  %v44 = vsel %vm39, %v12, 0
  %46 = vmatpush.msra.mxu0 0.0
  %47 = vmatpush.msra.mxu0 0.0
  %48 = vmatpush.msra.mxu0 0.0
  %49 = vmatpush.msra.mxu0 0.0
  %50 = vmatpush.msra.mxu0 0.0
  %51 = vmatpush.msra.mxu0 0.0
  %52 = vmatpush.msra.mxu0 0.0
  %53 = vmatpush.msra.mxu0 0.0
  %54 = vmatpush.msra.mxu0 0.0
  %55 = vmatpush.msra.mxu0 0.0
  %56 = vmatpush.msra.mxu0 0.0
  %57 = vmatpush.msra.mxu0 0.0
  %58 = vmatpush.msra.mxu0 %v24
  %59 = vmatpush.msra.mxu0 %v23
  %60 = vmatpush.msra.mxu0 %v22
  %61 = vmatpush.msra.mxu0 %v21
  %62 = vmatmul.f32.gmra.mxu0 %v41
  %v63 = vpop.f32.mrf.mxu0
  %v64 = vadd.f32 0.0, %v63
  %65 = vmatmul.f32.gmra.mxu0 %v44
  %v66 = vpop.f32.mrf.mxu0
  %v67 = vadd.f32 0.0, %v66
  %68 = vdwg.mxu0
  %v70 = vsel %vm39, %v25, 0
  %v73 = vsel %vm39, %v26, 0
  %v76 = vsel %vm39, %v27, 0
  %v79 = vsel %vm39, %v28, 0
  %81 = vmatpush.msra.mxu0 0.0
  %82 = vmatpush.msra.mxu0 0.0
  %83 = vmatpush.msra.mxu0 0.0
  %84 = vmatpush.msra.mxu0 0.0
  %85 = vmatpush.msra.mxu0 0.0
  %86 = vmatpush.msra.mxu0 0.0
  %87 = vmatpush.msra.mxu0 0.0
  %88 = vmatpush.msra.mxu0 0.0
  %89 = vmatpush.msra.mxu0 0.0
  %90 = vmatpush.msra.mxu0 0.0
  %91 = vmatpush.msra.mxu0 0.0
  %92 = vmatpush.msra.mxu0 0.0
  %93 = vmatpush.msra.mxu0 %v18
  %94 = vmatpush.msra.mxu0 %v17
  %95 = vmatpush.msra.mxu0 %v16
  %96 = vmatpush.msra.mxu0 %v15
  %97 = vmatmul.f32.gmra.mxu0 %v70
  %v98 = vpop.f32.mrf.mxu0
  %v99 = vadd.f32 0.0, %v98
  %100 = vmatmul.f32.gmra.mxu0 %v73
  %v101 = vpop.f32.mrf.mxu0
  %v102 = vadd.f32 0.0, %v101
  %103 = vmatmul.f32.gmra.mxu0 %v76
  %v104 = vpop.f32.mrf.mxu0
  %v105 = vadd.f32 0.0, %v104
  %106 = vmatmul.f32.gmra.mxu0 %v79
  %v107 = vpop.f32.mrf.mxu0
  %v108 = vadd.f32 0.0, %v107
  %109 = vdwg.mxu0
  %v111 = vsel %vm39, %v13, 0
  %v114 = vsel %vm39, %v14, 0
  %116 = vmatpush.msra.mxu0 0.0
  %117 = vmatpush.msra.mxu0 0.0
  %118 = vmatpush.msra.mxu0 0.0
  %119 = vmatpush.msra.mxu0 0.0
  %120 = vmatpush.msra.mxu0 0.0
  %121 = vmatpush.msra.mxu0 0.0
  %122 = vmatpush.msra.mxu0 0.0
  %123 = vmatpush.msra.mxu0 0.0
  %124 = vmatpush.msra.mxu0 0.0
  %125 = vmatpush.msra.mxu0 0.0
  %126 = vmatpush.msra.mxu0 0.0
  %127 = vmatpush.msra.mxu0 0.0
  %128 = vmatpush.msra.mxu0 %v32
  %129 = vmatpush.msra.mxu0 %v31
  %130 = vmatpush.msra.mxu0 %v30
  %131 = vmatpush.msra.mxu0 %v29
  %132 = vmatmul.f32.gmra.mxu0 %v111
  %v133 = vpop.f32.mrf.mxu0
  %v134 = vadd.f32 0.0, %v133
  %135 = vmatmul.f32.gmra.mxu0 %v114
  %v136 = vpop.f32.mrf.mxu0
  %v137 = vadd.f32 0.0, %v136
  %138 = vdwg.mxu0
  %143 = vrot.lane.b32.xlu0 %v99, 16
  %v144 = vpop.permute.xlu0 %143
  %145 = vrot.lane.b32.xlu0 %v102, 16
  %v146 = vpop.permute.xlu0 %145
  %147 = vrot.lane.b32.xlu0 %v105, 16
  %v148 = vpop.permute.xlu0 %147
  %149 = vrot.lane.b32.xlu0 %v108, 16
  %v150 = vpop.permute.xlu0 %149
  %155 = vrot.lane.b32.xlu0 %v99, 32
  %v156 = vpop.permute.xlu0 %155
  %157 = vrot.lane.b32.xlu0 %v102, 32
  %v158 = vpop.permute.xlu0 %157
  %159 = vrot.lane.b32.xlu0 %v105, 32
  %v160 = vpop.permute.xlu0 %159
  %161 = vrot.lane.b32.xlu0 %v108, 32
  %v162 = vpop.permute.xlu0 %161
  %167 = vrot.lane.b32.xlu0 %v99, 48
  %v168 = vpop.permute.xlu0 %167
  %169 = vrot.lane.b32.xlu0 %v102, 48
  %v170 = vpop.permute.xlu0 %169
  %171 = vrot.lane.b32.xlu0 %v105, 48
  %v172 = vpop.permute.xlu0 %171
  %173 = vrot.lane.b32.xlu0 %v108, 48
  %v174 = vpop.permute.xlu0 %173
  %vm179 = vcmask 130048
  %v180 = vsel %vm179, %v99, %v144
  %v181 = vsel %vm179, %v102, %v146
  %v182 = vsel %vm179, %v105, %v148
  %v183 = vsel %vm179, %v108, %v150
  %v184 = vsel %vm39, %v180, %v156
  %v185 = vsel %vm39, %v181, %v158
  %v186 = vsel %vm39, %v182, %v160
  %v187 = vsel %vm39, %v183, %v162
  %vm188 = vcmask 392192
  %v189 = vsel %vm188, %v184, %v168
  %v190 = vsel %vm188, %v185, %v170
  %v191 = vsel %vm188, %v186, %v172
  %v192 = vsel %vm188, %v187, %v174
  %v193 = vlaneseq
  %v194 = vshrl.u32 %v193, 7
  %v195 = vadd.s32 %v194, 8
  %v196 = vadd.s32 %v194, 16
  %v197 = vadd.s32 %v194, 24
  %v198 = vshra.s32 %v194, 3
  %v199 = vshra.s32 %v195, 3
  %v200 = vshra.s32 %v196, 3
  %v201 = vshra.s32 %v197, 3
  %v202 = vlaneseq
  %v203 = vand.u32 %v202, 127
  %v204 = vshra.s32 %v203, 4
  %vm205 = vcmp.eq.s32.totalorder %v198, %v204
  %vm206 = vcmp.eq.s32.totalorder %v199, %v204
  %vm207 = vcmp.eq.s32.totalorder %v200, %v204
  %vm208 = vcmp.eq.s32.totalorder %v201, %v204
  %v209 = vsel %vm205, %v189, 0.0
  %v210 = vsel %vm206, %v190, 0.0
  %v211 = vsel %vm207, %v191, 0.0
  %v212 = vsel %vm208, %v192, 0.0
  %v214 = vsel %vm39, %v64, 0
  %v217 = vsel %vm39, %v67, 0
  %219 = vmatpush.msra.mxu0 0.0
  %220 = vmatpush.msra.mxu0 0.0
  %221 = vmatpush.msra.mxu0 0.0
  %222 = vmatpush.msra.mxu0 0.0
  %223 = vmatpush.msra.mxu0 0.0
  %224 = vmatpush.msra.mxu0 0.0
  %225 = vmatpush.msra.mxu0 0.0
  %226 = vmatpush.msra.mxu0 0.0
  %227 = vmatpush.msra.mxu0 0.0
  %228 = vmatpush.msra.mxu0 0.0
  %229 = vmatpush.msra.mxu0 0.0
  %230 = vmatpush.msra.mxu0 0.0
  %231 = vmatpush.msra.mxu0 %v212
  %232 = vmatpush.msra.mxu0 %v211
  %233 = vmatpush.msra.mxu0 %v210
  %234 = vmatpush.msra.mxu0 %v209
  %235 = vmatmul.f32.gmra.mxu0 %v214
  %v236 = vpop.f32.mrf.mxu0
  %v237 = vadd.f32 %v19, %v236
  %238 = vmatmul.f32.gmra.mxu0 %v217
  %v239 = vpop.f32.mrf.mxu0
  %v240 = vadd.f32 %v20, %v239
  %241 = vdwg.mxu0
  %vm242 = vcmask 523264
  %v243 = vsel %vm242, %v237, -inf
  %v244 = vsel %vm242, %v240, -inf
  %v245 = vmax.f32 %v243, %v244
  %v246 = vrot.slane %v245, 4
  %v247 = vmax.f32 %v245, %v246
  %v248 = vrot.slane %v247, 2
  %v249 = vmax.f32 %v247, %v248
  %v250 = vrot.slane %v249, 1
  %v251 = vmax.f32 %v249, %v250
  %v252 = vsub.f32 %v237, %v251
  %v253 = vsub.f32 %v240, %v251
  %v254 = vmul.f32 %v252, 1.442695
  %v255 = vpow.pop %v254
  %v256 = vmul.f32 %v253, 1.442695
  %v257 = vpow.pop %v256
  %v258 = vsel %vm242, %v255, 0.0
  %v259 = vsel %vm242, %v257, 0.0
  %v260 = vadd.f32 %v258, %v259
  %v261 = vrot.slane %v260, 4
  %v262 = vadd.f32 %v260, %v261
  %v263 = vrot.slane %v262, 2
  %v264 = vadd.f32 %v262, %v263
  %v265 = vrot.slane %v264, 1
  %v266 = vadd.f32 %v264, %v265
  %v267 = vrcp.pop %v266
  %v268 = vmul.f32 %v266, %v267
  %v269 = vsub.f32 2.0, %v268
  %v270 = vmul.f32 %v267, %v269
  %v271 = vmul.f32 %v255, %v270
  %v272 = vmul.f32 %v257, %v270
  %v273 = vadd.s32 %v194, 32
  %v274 = vadd.s32 %v194, 40
  %v275 = vadd.s32 %v194, 48
  %v276 = vadd.s32 %v194, 56
  %v277 = vshra.s32 %v194, 4
  %v278 = vshra.s32 %v195, 4
  %v279 = vshra.s32 %v196, 4
  %v280 = vshra.s32 %v197, 4
  %v281 = vshra.s32 %v273, 4
  %v282 = vshra.s32 %v274, 4
  %v283 = vshra.s32 %v275, 4
  %v284 = vshra.s32 %v276, 4
  %v285 = vshra.s32 %v203, 3
  %vm286 = vcmp.eq.s32.totalorder %v277, %v285
  %vm287 = vcmp.eq.s32.totalorder %v278, %v285
  %vm288 = vcmp.eq.s32.totalorder %v279, %v285
  %vm289 = vcmp.eq.s32.totalorder %v280, %v285
  %vm290 = vcmp.eq.s32.totalorder %v281, %v285
  %vm291 = vcmp.eq.s32.totalorder %v282, %v285
  %vm292 = vcmp.eq.s32.totalorder %v283, %v285
  %vm293 = vcmp.eq.s32.totalorder %v284, %v285
  %v294 = vsel %vm286, %v134, 0.0
  %v295 = vsel %vm287, %v137, 0.0
  %v296 = vsel %vm288, %v134, 0.0
  %v297 = vsel %vm289, %v137, 0.0
  %v298 = vsel %vm290, %v134, 0.0
  %v299 = vsel %vm291, %v137, 0.0
  %v300 = vsel %vm292, %v134, 0.0
  %v301 = vsel %vm293, %v137, 0.0
  %v303 = vsel %vm242, %v271, 0
  %v306 = vsel %vm242, %v272, 0
  %308 = vmatpush.msra.mxu0 0.0
  %309 = vmatpush.msra.mxu0 0.0
  %310 = vmatpush.msra.mxu0 0.0
  %311 = vmatpush.msra.mxu0 0.0
  %312 = vmatpush.msra.mxu0 0.0
  %313 = vmatpush.msra.mxu0 0.0
  %314 = vmatpush.msra.mxu0 0.0
  %315 = vmatpush.msra.mxu0 0.0
  %316 = vmatpush.msra.mxu0 %v301
  %317 = vmatpush.msra.mxu0 %v300
  %318 = vmatpush.msra.mxu0 %v299
  %319 = vmatpush.msra.mxu0 %v298
  %320 = vmatpush.msra.mxu0 %v297
  %321 = vmatpush.msra.mxu0 %v296
  %322 = vmatpush.msra.mxu0 %v295
  %323 = vmatpush.msra.mxu0 %v294
  %324 = vmatmul.f32.gmra.mxu0 %v303
  %v325 = vpop.f32.mrf.mxu0
  %v326 = vadd.f32 0.0, %v325
  %327 = vmatmul.f32.gmra.mxu0 %v306
  %v328 = vpop.f32.mrf.mxu0
  %v329 = vadd.f32 0.0, %v328
  %330 = vdwg.mxu0
  %v332 = vsel %vm39, %v326, 0
  %v335 = vsel %vm39, %v329, 0
  %337 = vmatpush.msra.mxu0 0.0
  %338 = vmatpush.msra.mxu0 0.0
  %339 = vmatpush.msra.mxu0 0.0
  %340 = vmatpush.msra.mxu0 0.0
  %341 = vmatpush.msra.mxu0 0.0
  %342 = vmatpush.msra.mxu0 0.0
  %343 = vmatpush.msra.mxu0 0.0
  %344 = vmatpush.msra.mxu0 0.0
  %345 = vmatpush.msra.mxu0 0.0
  %346 = vmatpush.msra.mxu0 0.0
  %347 = vmatpush.msra.mxu0 0.0
  %348 = vmatpush.msra.mxu0 0.0
  %349 = vmatpush.msra.mxu0 %v36
  %350 = vmatpush.msra.mxu0 %v35
  %351 = vmatpush.msra.mxu0 %v34
  %352 = vmatpush.msra.mxu0 %v33
  %353 = vmatmul.f32.gmra.mxu0 %v332
  %v354 = vpop.f32.mrf.mxu0
  %v355 = vadd.f32 %v11, %v354
  %356 = vmatmul.f32.gmra.mxu0 %v335
  %v357 = vpop.f32.mrf.mxu0
  %v358 = vadd.f32 %v12, %v357
  %359 = vdwg.mxu0
  %v360 = vsel %vm39, %v355, 0.0
  %361 = vadd.xlane.f32.xlu0 %v360
  %v362 = vpop.xlane.xlu0 %361
  %v363 = vsel %vm39, %v358, 0.0
  %364 = vadd.xlane.f32.xlu0 %v363
  %v365 = vpop.xlane.xlu0 %364
  %v366 = vrcp.pop 32.0
  %v367 = vmul.f32 32.0, %v366
  %v368 = vsub.f32 1.0, %v367
  %v369 = vmul.f32 %v366, %v368
  %v370 = vadd.f32 %v366, %v369
  %vm371 = vweird.f32 %v366
  %v372 = vsel %vm371, %v366, %v370
  %v373 = vmul.f32 %v362, %v372
  %v374 = vmul.f32 %v365, %v372
  %v375 = vsub.f32 %v355, %v373
  %v376 = vsub.f32 %v358, %v374
  %v377 = vmul.f32 %v375, %v375
  %v378 = vmul.f32 %v376, %v376
  %v379 = vsel %vm39, %v377, 0.0
  %380 = vadd.xlane.f32.xlu0 %v379
  %v381 = vpop.xlane.xlu0 %380
  %v382 = vsel %vm39, %v378, 0.0
  %383 = vadd.xlane.f32.xlu0 %v382
  %v384 = vpop.xlane.xlu0 %383
  %v385 = vmul.f32 %v381, %v372
  %v386 = vmul.f32 %v384, %v372
  %v387 = vadd.f32 %v385, 1e-05
  %v388 = vadd.f32 %v386, 1e-05
  %v389 = vrsqrt.pop %v387
  %v390 = vmul.f32 %v389, %v387
  %v391 = vmul.f32 %v390, %v389
  %v392 = vmul.f32 0.5, %v391
  %v393 = vsub.f32 1.5, %v392
  %v394 = vmul.f32 %v389, %v393
  %vm395 = vweird.f32 %v387
  %vm396 = vweird.f32 %v389
  %vm397 = vmor %vm395, %vm396
  %v398 = vsel %vm397, %v389, %v394
  %v399 = vrsqrt.pop %v388
  %v400 = vmul.f32 %v399, %v388
  %v401 = vmul.f32 %v400, %v399
  %v402 = vmul.f32 0.5, %v401
  %v403 = vsub.f32 1.5, %v402
  %v404 = vmul.f32 %v399, %v403
  %vm405 = vweird.f32 %v388
  %vm406 = vweird.f32 %v399
  %vm407 = vmor %vm405, %vm406
  %v408 = vsel %vm407, %v399, %v404
  %v409 = vmul.f32 %v375, %v398
  %v410 = vmul.f32 %v376, %v408
  %v411 = vperm.slane %v37, 0
  %v412 = vmul.f32 %v409, %v411
  %v413 = vmul.f32 %v410, %v411
  %v414 = vperm.slane %v38, 0
  %v415 = vadd.f32 %v412, %v414
  %v416 = vadd.f32 %v413, %v414
  %417 = vrot.lane.b32.xlu0 %v271, 32
  %v418 = vpop.permute.xlu0 %417
  %419 = vrot.lane.b32.xlu0 %v272, 32
  %v420 = vpop.permute.xlu0 %419
  %v423 = vsel %vm39, %v415, %v418
  %v424 = vsel %vm39, %v416, %v420
  %vm425 = vcmask 785408
  %v426 = vsel %vm425, %v423, 0.0
  %v427 = vsel %vm425, %v424, 0.0
  %428 = vst [vmem:[%s2] sm:$0xff] %v426
  %429 = vst [vmem:[%s2 + $0x8] sm:$0xff] %v427
  // Predicated region
  $region10: #{multi_head_attention.1} parent=0 // pred_check
    _
  $region11: #{multi_head_attention.1} parent=0 // pred_check_branch
    %431 = sbr.rel (0) target = $region13
  $region12: #{multi_head_attention.1} parent=0 // pred_region
    _
  $region13: #{multi_head_attention.1} parent=0 // pred_fallthru
    _
  // Predicated region
  $region14: #{multi_head_attention.1} parent=0 // pred_check
    _
  $region15: #{multi_head_attention.1} parent=0 // pred_check_branch
    %433 = sbr.rel (0) target = $region17
  $region16: #{multi_head_attention.1} parent=0 // pred_region
    _
  $region17: #{multi_head_attention.1} parent=0 // pred_fallthru
    _

</llo_original>
